<compile_context>
chip_gen: v7x
topology: tpu7x:2x2x1
jax: 0.10.0
libtpu: 0.0.40
codegen_flags: <defaults>
</compile_context>

<pallas_src>
import jax
import jax.numpy as jnp
from jax.experimental import pallas as pl
from jax.experimental.pallas import tpu as pltpu

LN_EPS = 1e-5


def _round_up(x, m):
    return ((x + m - 1) // m) * m


def actor_kernel(x_ref, w1_ref, b1_ref, w2_ref, b2_ref, g_ref, beta_ref,
                 w3_ref, b3_ref, out_ref):
    # f32 state tile -> bf16 MXU operands (cast rides spare VPU slots).
    x = x_ref[...].astype(jnp.bfloat16)                               # (TB, S)

    # --- Linear 1 + ReLU (bf16 MXU, f32 accumulate) ---
    h1 = jnp.dot(x, w1_ref[...], preferred_element_type=jnp.float32) + b1_ref[...]
    h1 = jnp.maximum(h1, 0.0)

    # --- Linear 2 ---
    h2 = jnp.dot(h1.astype(jnp.bfloat16), w2_ref[...],
                 preferred_element_type=jnp.float32) + b2_ref[...]

    # --- LayerNorm (over last dim, eps=1e-5, elementwise affine; f32 math) ---
    mean = jnp.mean(h2, axis=-1, keepdims=True)
    cent = h2 - mean
    var = jnp.mean(cent * cent, axis=-1, keepdims=True)
    hn = cent * jax.lax.rsqrt(var + LN_EPS) * g_ref[...] + beta_ref[...]

    # --- ReLU ---
    hn = jnp.maximum(hn, 0.0)

    # --- Linear 3 (1/temperature already folded into w3/b3) + tanh ---
    out = jnp.dot(hn.astype(jnp.bfloat16), w3_ref[...],
                  preferred_element_type=jnp.float32) + b3_ref[...]
    out_ref[...] = jnp.tanh(out)                                      # (TB, A)


def prepare_params(params, temperature=1.0):
    """One-time parameter preparation (call once, reuse across forward calls):
    fold 1/temperature into the last layer and pre-cast matmul weights to bf16.
    The divide happens before tanh in the reference, so folding is exact math-wise
    (bf16 rounding of the fold is negligible; identical at temperature=1)."""
    w1, b1, w2, b2, gamma, beta, w3, b3 = params
    inv_t = 1.0 / float(temperature)
    return (
        w1.astype(jnp.bfloat16), b1.astype(jnp.float32),
        w2.astype(jnp.bfloat16), b2.astype(jnp.float32),
        gamma.astype(jnp.float32), beta.astype(jnp.float32),
        (w3 * inv_t).astype(jnp.bfloat16), (b3 * inv_t).astype(jnp.float32),
    )


def actor_forward(state, prepared, block_b=2048):
    """state: (B, state_dim) float32 -> (B, action_dim) float32 (tanh'd actions).
    `prepared` comes from prepare_params()."""
    B, S = state.shape
    w1, b1, w2, b2, gamma, beta, w3, b3 = prepared
    H = w1.shape[1]
    A = w3.shape[1]

    # Batch tile: sublane-aligned, capped so the grid has >=2 steps at large B
    # (lets dimension_semantics=("parallel",) shard across v7x's two TCs),
    # and never larger than the (rounded-up) batch.
    TB = min(block_b, _round_up(pl.cdiv(B, 2), 16), _round_up(B, 8))
    TB = max(TB, 8)
    grid = (pl.cdiv(B, TB),)   # ragged tail block handled by Pallas masking

    # Weights/biases: constant block index -> loaded once, resident in VMEM.
    resident = lambda shape: pl.BlockSpec(shape, lambda i: (0, 0))

    out = pl.pallas_call(
        actor_kernel,
        out_shape=jax.ShapeDtypeStruct((B, A), jnp.float32),
        grid=grid,
        in_specs=[
            pl.BlockSpec((TB, S), lambda i: (i, 0)),   # streamed state tile (f32)
            resident((S, H)),  resident((1, H)),       # w1 (bf16), b1
            resident((H, H)),  resident((1, H)),       # w2 (bf16), b2
            resident((1, H)),  resident((1, H)),       # gamma, beta
            resident((H, A)),  resident((1, A)),       # w3 (bf16, 1/T folded), b3
        ],
        out_specs=pl.BlockSpec((TB, A), lambda i: (i, 0)),
        compiler_params=pltpu.CompilerParams(
            dimension_semantics=("parallel",)),
    )(state, w1, b1, w2, b2, gamma, beta, w3, b3)

    return out


def init_params(key, state_dim, action_dim, hidden_size=64):
    """Deterministic synthetic init mirroring the PyTorch module's shapes.
    Final layer weight ~ U(-0.003, 0.003) as in the reference."""
    k1, k2, k3, k4, k5 = jax.random.split(key, 5)
    # weights stored as (in, out)
    w1 = jax.random.uniform(k1, (state_dim, hidden_size), jnp.float32, -0.1, 0.1)
    b1 = jax.random.uniform(k2, (1, hidden_size), jnp.float32, -0.1, 0.1)
    w2 = jax.random.uniform(k3, (hidden_size, hidden_size), jnp.float32, -0.1, 0.1)
    b2 = jax.random.uniform(k4, (hidden_size, hidden_size), jnp.float32, -0.1, 0.1)[:1]
    gamma = jnp.ones((1, hidden_size), jnp.float32)    # LayerNorm weight init = 1
    beta = jnp.zeros((1, hidden_size), jnp.float32)    # LayerNorm bias init = 0
    w3 = jax.random.uniform(k5, (hidden_size, action_dim), jnp.float32, -0.003, 0.003)
    b3 = jnp.zeros((1, action_dim), jnp.float32)
    return (w1, b1, w2, b2, gamma, beta, w3, b3)


def actor_reference(state, params, temperature=1.0):
    """Pure-JAX reference with the same bf16-operand / f32-accumulate matmuls."""
    w1, b1, w2, b2, gamma, beta, w3, b3 = params
    bf = jnp.bfloat16
    dot = lambda a, b: jnp.dot(a.astype(bf), b.astype(bf),
                               preferred_element_type=jnp.float32)
    h = jnp.maximum(dot(state, w1) + b1, 0.0)
    h = dot(h, w2) + b2
    mean = jnp.mean(h, axis=-1, keepdims=True)
    cent = h - mean
    var = jnp.mean(cent * cent, axis=-1, keepdims=True)
    h = cent * jax.lax.rsqrt(var + LN_EPS) * gamma + beta
    h = jnp.maximum(h, 0.0)
    out = (dot(h, w3) + b3) / temperature
    return jnp.tanh(out)


if __name__ == "__main__":
    key = jax.random.PRNGKey(0)
    B, state_dim, action_dim, hidden = 8, 32, 8, 64
    temperature = 1.0

    kx, kp = jax.random.split(key)
    state = jax.random.normal(kx, (B, state_dim), jnp.float32)
    params = init_params(kp, state_dim, action_dim, hidden)
    prepared = prepare_params(params, temperature)

    out = actor_forward(state, prepared)
    out = jax.block_until_ready(out)

    ref = actor_reference(state, params, temperature)
    assert out.shape == (B, action_dim), out.shape
    assert bool(jnp.allclose(out, ref, atol=1e-4, rtol=1e-4)), "mismatch vs reference"
    print("KERNEL_OK")
</pallas_src>

<mosaic_0001>
module attributes {stable_mosaic.version = 11 : i64} {
  func.func @actor_kernel(%arg0: i32, %arg1: memref<8x32xf32, #tpu.memory_space<vmem>>, %arg2: memref<32x64xbf16, #tpu.memory_space<vmem>>, %arg3: memref<1x64xf32, #tpu.memory_space<vmem>>, %arg4: memref<64x64xbf16, #tpu.memory_space<vmem>>, %arg5: memref<1x64xf32, #tpu.memory_space<vmem>>, %arg6: memref<1x64xf32, #tpu.memory_space<vmem>>, %arg7: memref<1x64xf32, #tpu.memory_space<vmem>>, %arg8: memref<64x8xbf16, #tpu.memory_space<vmem>>, %arg9: memref<1x8xf32, #tpu.memory_space<vmem>>, %arg10: memref<8x8xf32, #tpu.memory_space<vmem>>) attributes {dimension_semantics = [#tpu.dimension_semantics<parallel>], iteration_bounds = array<i64: 1>, scalar_prefetch = 0 : i64, scratch_operands = 0 : i64, tpu.core_type = #tpu.core_type<tc>, window_params = [{transform_indices = @transform_0, window_bounds = array<i64: 8, 32>}, {pipeline_mode = #tpu.pipeline_mode<synchronous>, transform_indices = @transform_1, window_bounds = array<i64: 32, 64>}, {pipeline_mode = #tpu.pipeline_mode<synchronous>, transform_indices = @transform_2, window_bounds = array<i64: 1, 64>}, {pipeline_mode = #tpu.pipeline_mode<synchronous>, transform_indices = @transform_3, window_bounds = array<i64: 64, 64>}, {pipeline_mode = #tpu.pipeline_mode<synchronous>, transform_indices = @transform_4, window_bounds = array<i64: 1, 64>}, {pipeline_mode = #tpu.pipeline_mode<synchronous>, transform_indices = @transform_5, window_bounds = array<i64: 1, 64>}, {pipeline_mode = #tpu.pipeline_mode<synchronous>, transform_indices = @transform_6, window_bounds = array<i64: 1, 64>}, {pipeline_mode = #tpu.pipeline_mode<synchronous>, transform_indices = @transform_7, window_bounds = array<i64: 64, 8>}, {pipeline_mode = #tpu.pipeline_mode<synchronous>, transform_indices = @transform_8, window_bounds = array<i64: 1, 8>}, {transform_indices = @transform_9, window_bounds = array<i64: 8, 8>}]} {
    %c0 = arith.constant 0 : index
    %c0_0 = arith.constant 0 : index
    %0 = vector.load %arg1[%c0, %c0_0] : memref<8x32xf32, #tpu.memory_space<vmem>>, vector<8x32xf32>
    %1 = arith.truncf %0 : vector<8x32xf32> to vector<8x32xbf16>
    %c0_1 = arith.constant 0 : index
    %c0_2 = arith.constant 0 : index
    %2 = vector.load %arg2[%c0_1, %c0_2] : memref<32x64xbf16, #tpu.memory_space<vmem>>, vector<32x64xbf16>
    %cst = arith.constant dense<0.000000e+00> : vector<8x64xf32>
    %3 = tpu.matmul %1, %2, %cst {dimension_numbers = #tpu.dot_dimension_numbers<[1], [0], [0], [1], [0, 0, 1, 1], [], []>} : vector<8x32xbf16>, vector<32x64xbf16>, vector<8x64xf32> -> vector<8x64xf32>
    %c0_3 = arith.constant 0 : index
    %c0_4 = arith.constant 0 : index
    %4 = vector.load %arg3[%c0_3, %c0_4] : memref<1x64xf32, #tpu.memory_space<vmem>>, vector<1x64xf32>
    %5 = vector.broadcast %4 : vector<1x64xf32> to vector<8x64xf32>
    %6 = arith.addf %3, %5 : vector<8x64xf32>
    %cst_5 = arith.constant 0.000000e+00 : f32
    %7 = vector.broadcast %cst_5 : f32 to vector<8x64xf32>
    %8 = arith.maximumf %6, %7 : vector<8x64xf32>
    %9 = arith.truncf %8 : vector<8x64xf32> to vector<8x64xbf16>
    %c0_6 = arith.constant 0 : index
    %c0_7 = arith.constant 0 : index
    %10 = vector.load %arg4[%c0_6, %c0_7] : memref<64x64xbf16, #tpu.memory_space<vmem>>, vector<64x64xbf16>
    %cst_8 = arith.constant dense<0.000000e+00> : vector<8x64xf32>
    %11 = tpu.matmul %9, %10, %cst_8 {dimension_numbers = #tpu.dot_dimension_numbers<[1], [0], [0], [1], [0, 0, 1, 1], [], []>} : vector<8x64xbf16>, vector<64x64xbf16>, vector<8x64xf32> -> vector<8x64xf32>
    %c0_9 = arith.constant 0 : index
    %c0_10 = arith.constant 0 : index
    %12 = vector.load %arg5[%c0_9, %c0_10] : memref<1x64xf32, #tpu.memory_space<vmem>>, vector<1x64xf32>
    %13 = vector.broadcast %12 : vector<1x64xf32> to vector<8x64xf32>
    %14 = arith.addf %11, %13 : vector<8x64xf32>
    %cst_11 = arith.constant dense<0.000000e+00> : vector<8xf32>
    %15 = vector.multi_reduction <add>, %14, %cst_11 [1] : vector<8x64xf32> to vector<8xf32>
    %16 = vector.shape_cast %15 : vector<8xf32> to vector<8x1xf32>
    %cst_12 = arith.constant 6.400000e+01 : f32
    %17 = vector.broadcast %cst_12 : f32 to vector<8x1xf32>
    %18 = arith.divf %16, %17 : vector<8x1xf32>
    %19 = vector.broadcast %18 : vector<8x1xf32> to vector<8x64xf32>
    %20 = arith.subf %14, %19 : vector<8x64xf32>
    %21 = arith.mulf %20, %20 : vector<8x64xf32>
    %cst_13 = arith.constant dense<0.000000e+00> : vector<8xf32>
    %22 = vector.multi_reduction <add>, %21, %cst_13 [1] : vector<8x64xf32> to vector<8xf32>
    %23 = vector.shape_cast %22 : vector<8xf32> to vector<8x1xf32>
    %cst_14 = arith.constant 6.400000e+01 : f32
    %24 = vector.broadcast %cst_14 : f32 to vector<8x1xf32>
    %25 = arith.divf %23, %24 : vector<8x1xf32>
    %cst_15 = arith.constant 9.99999974E-6 : f32
    %26 = vector.broadcast %cst_15 : f32 to vector<8x1xf32>
    %27 = arith.addf %25, %26 : vector<8x1xf32>
    %28 = math.rsqrt %27 : vector<8x1xf32>
    %29 = vector.broadcast %28 : vector<8x1xf32> to vector<8x64xf32>
    %30 = arith.mulf %20, %29 : vector<8x64xf32>
    %c0_16 = arith.constant 0 : index
    %c0_17 = arith.constant 0 : index
    %31 = vector.load %arg6[%c0_16, %c0_17] : memref<1x64xf32, #tpu.memory_space<vmem>>, vector<1x64xf32>
    %32 = vector.broadcast %31 : vector<1x64xf32> to vector<8x64xf32>
    %33 = arith.mulf %30, %32 : vector<8x64xf32>
    %c0_18 = arith.constant 0 : index
    %c0_19 = arith.constant 0 : index
    %34 = vector.load %arg7[%c0_18, %c0_19] : memref<1x64xf32, #tpu.memory_space<vmem>>, vector<1x64xf32>
    %35 = vector.broadcast %34 : vector<1x64xf32> to vector<8x64xf32>
    %36 = arith.addf %33, %35 : vector<8x64xf32>
    %cst_20 = arith.constant 0.000000e+00 : f32
    %37 = vector.broadcast %cst_20 : f32 to vector<8x64xf32>
    %38 = arith.maximumf %36, %37 : vector<8x64xf32>
    %39 = arith.truncf %38 : vector<8x64xf32> to vector<8x64xbf16>
    %c0_21 = arith.constant 0 : index
    %c0_22 = arith.constant 0 : index
    %40 = vector.load %arg8[%c0_21, %c0_22] : memref<64x8xbf16, #tpu.memory_space<vmem>>, vector<64x8xbf16>
    %cst_23 = arith.constant dense<0.000000e+00> : vector<8x8xf32>
    %41 = tpu.matmul %39, %40, %cst_23 {dimension_numbers = #tpu.dot_dimension_numbers<[1], [0], [0], [1], [0, 0, 1, 1], [], []>} : vector<8x64xbf16>, vector<64x8xbf16>, vector<8x8xf32> -> vector<8x8xf32>
    %c0_24 = arith.constant 0 : index
    %c0_25 = arith.constant 0 : index
    %42 = vector.load %arg9[%c0_24, %c0_25] : memref<1x8xf32, #tpu.memory_space<vmem>>, vector<1x8xf32>
    %43 = vector.broadcast %42 : vector<1x8xf32> to vector<8x8xf32>
    %44 = arith.addf %41, %43 : vector<8x8xf32>
    %45 = math.tanh %44 : vector<8x8xf32>
    %c0_26 = arith.constant 0 : index
    %c0_27 = arith.constant 0 : index
    %46 = vector.load %arg10[%c0_26, %c0_27] : memref<8x8xf32, #tpu.memory_space<vmem>>, vector<8x8xf32>
    tpu.vector_store %arg10[%c0_26, %c0_27], %45 {strides = array<i32>} : memref<8x8xf32, #tpu.memory_space<vmem>>, vector<8x8xf32>,
    return
  }
  func.func @transform_0(%arg0: i32) -> (i32, i32) {
    %c0_i32 = arith.constant 0 : i32
    %c0_i32_0 = arith.constant 0 : i32
    return %arg0, %c0_i32 : i32, i32
  }
  func.func @transform_1(%arg0: i32) -> (i32, i32) {
    %c0_i32 = arith.constant 0 : i32
    %c0_i32_0 = arith.constant 0 : i32
    %c0_i32_1 = arith.constant 0 : i32
    return %c0_i32, %c0_i32_0 : i32, i32
  }
  func.func @transform_2(%arg0: i32) -> (i32, i32) {
    %c0_i32 = arith.constant 0 : i32
    %c0_i32_0 = arith.constant 0 : i32
    %c0_i32_1 = arith.constant 0 : i32
    return %c0_i32, %c0_i32_0 : i32, i32
  }
  func.func @transform_3(%arg0: i32) -> (i32, i32) {
    %c0_i32 = arith.constant 0 : i32
    %c0_i32_0 = arith.constant 0 : i32
    %c0_i32_1 = arith.constant 0 : i32
    return %c0_i32, %c0_i32_0 : i32, i32
  }
  func.func @transform_4(%arg0: i32) -> (i32, i32) {
    %c0_i32 = arith.constant 0 : i32
    %c0_i32_0 = arith.constant 0 : i32
    %c0_i32_1 = arith.constant 0 : i32
    return %c0_i32, %c0_i32_0 : i32, i32
  }
  func.func @transform_5(%arg0: i32) -> (i32, i32) {
    %c0_i32 = arith.constant 0 : i32
    %c0_i32_0 = arith.constant 0 : i32
    %c0_i32_1 = arith.constant 0 : i32
    return %c0_i32, %c0_i32_0 : i32, i32
  }
  func.func @transform_6(%arg0: i32) -> (i32, i32) {
    %c0_i32 = arith.constant 0 : i32
    %c0_i32_0 = arith.constant 0 : i32
    %c0_i32_1 = arith.constant 0 : i32
    return %c0_i32, %c0_i32_0 : i32, i32
  }
  func.func @transform_7(%arg0: i32) -> (i32, i32) {
    %c0_i32 = arith.constant 0 : i32
    %c0_i32_0 = arith.constant 0 : i32
    %c0_i32_1 = arith.constant 0 : i32
    return %c0_i32, %c0_i32_0 : i32, i32
  }
  func.func @transform_8(%arg0: i32) -> (i32, i32) {
    %c0_i32 = arith.constant 0 : i32
    %c0_i32_0 = arith.constant 0 : i32
    %c0_i32_1 = arith.constant 0 : i32
    return %c0_i32, %c0_i32_0 : i32, i32
  }
  func.func @transform_9(%arg0: i32) -> (i32, i32) {
    %c0_i32 = arith.constant 0 : i32
    %c0_i32_0 = arith.constant 0 : i32
    return %arg0, %c0_i32 : i32, i32
  }
}

</mosaic_0001>

<llo_original>
// kernel: tpu_custom_call.1
$region0: #{tpu_custom_call.1}
  #allocation0 [shape = 'u32[]', space=smem, size = 0x4, offset = 0x4, fixed_abs, tag = 'smem constant byte address 0x4 - core index']
  #allocation1 [shape = 'u32[144,128]{1,0:T(1,128)}', space=vmem, size = 0x12000, scoped, tag = 'internal scratch']
  %s0 = inlined_call_operand.vmem [shape: f32[8,32], index: 0, kind: input, shape index: {}]
  %s1 = inlined_call_operand.hbm [shape: bf16[32,64], index: 1, kind: input, shape index: {}]
  %s2 = inlined_call_operand.vmem [shape: f32[1,64], index: 2, kind: input, shape index: {}]
  %s3 = inlined_call_operand.vmem [shape: bf16[64,64], index: 3, kind: input, shape index: {}]
  %s4 = inlined_call_operand.vmem [shape: f32[1,64], index: 4, kind: input, shape index: {}]
  %s5 = inlined_call_operand.vmem [shape: f32[1,64], index: 5, kind: input, shape index: {}]
  %s6 = inlined_call_operand.vmem [shape: f32[1,64], index: 6, kind: input, shape index: {}]
  %s7 = inlined_call_operand.vmem [shape: bf16[64,8], index: 7, kind: input, shape index: {}]
  %s8 = inlined_call_operand.vmem [shape: f32[1,8], index: 8, kind: input, shape index: {}]
  %s9 = inlined_call_operand.hbm [shape: f32[8,8], index: 9, kind: output, shape index: {}]
  %s10 = sld [smem:[#allocation0]]
  $region50: #{tpu_custom_call.1} parent=0
    _
  %s12 = ssub.s32 1, %s10
  %s13 = scalar_select 0, %s12, %s10
  $region1: #{tpu_custom_call.1} parent=0
    #allocation2 [shape = 'u8[8192]{0}', space=vmem, size = 0x2000, scoped, tag = 'input window, operand 1, single buffered']
    #allocation3 [shape = 's32[1]{0}', space=sflag, size = 0x4, scoped, tag = 'scoped memory for tpu_custom_call.1']
    #allocation4 [shape = 's32[1]{0}', space=sflag, size = 0x4, scoped, tag = 'scoped memory for tpu_custom_call.1']
    #allocation5 [shape = 'u8[4096]{0}', space=vmem, size = 0x1000, scoped, tag = 'output window, operand 0, single buffered']
    %14 = vsyncpa [#allocation3], 0
    %15 = vsyncpa [#allocation4], 0
    // Predicated region
    $region2: #{tpu_custom_call.1} parent=1 // pred_check
      _
    $region3: #{tpu_custom_call.1} parent=1 // pred_check_branch
      %17 = sbr.rel (0) target = $region5
    $region4: #{tpu_custom_call.1} parent=1 // pred_region
      _
    $region5: #{tpu_custom_call.1} parent=1 // pred_fallthru
      _
    // Predicated region
    $region6: #{tpu_custom_call.1} parent=1 // pred_check
      _
    $region7: #{tpu_custom_call.1} parent=1 // pred_check_branch
      %19 = sbr.rel (0) target = $region9
    $region8: #{tpu_custom_call.1} parent=1 // pred_region
      %s21 = ssub.s32 256, 256
      %22 = vsyncadd [#allocation3], %s21
      %s23 = sshll.u32 [#allocation2], 4
      %s24 = int_to_ptr.vmem [resolvable:$true] %s23
      %29 = dma.hbm_to_vmem [thread:$0]  %s1, 256, %s24, [#allocation3], 64, 64, 4
    $region9: #{tpu_custom_call.1} parent=1 // pred_fallthru
      _
    // Predicated region
    $region10: #{tpu_custom_call.1} parent=1 // pred_check
      _
    $region11: #{tpu_custom_call.1} parent=1 // pred_check_branch
      %31 = sbr.rel (0) target = $region13
    $region12: #{tpu_custom_call.1} parent=1 // pred_region
      _
    $region13: #{tpu_custom_call.1} parent=1 // pred_fallthru
      _
    // Predicated region
    $region14: #{tpu_custom_call.1} parent=1 // pred_check
      _
    $region15: #{tpu_custom_call.1} parent=1 // pred_check_branch
      %33 = sbr.rel (0) target = $region17
    $region16: #{tpu_custom_call.1} parent=1 // pred_region
      _
    $region17: #{tpu_custom_call.1} parent=1 // pred_fallthru
      _
    // Predicated region
    $region18: #{tpu_custom_call.1} parent=1 // pred_check
      _
    $region19: #{tpu_custom_call.1} parent=1 // pred_check_branch
      %35 = sbr.rel (0) target = $region21
    $region20: #{tpu_custom_call.1} parent=1 // pred_region
      _
    $region21: #{tpu_custom_call.1} parent=1 // pred_fallthru
      _
    // Predicated region
    $region22: #{tpu_custom_call.1} parent=1 // pred_check
      _
    $region23: #{tpu_custom_call.1} parent=1 // pred_check_branch
      %37 = sbr.rel (0) target = $region25
    $region24: #{tpu_custom_call.1} parent=1 // pred_region
      _
    $region25: #{tpu_custom_call.1} parent=1 // pred_fallthru
      _
    // Predicated region
    $region26: #{tpu_custom_call.1} parent=1 // pred_check
      _
    $region27: #{tpu_custom_call.1} parent=1 // pred_check_branch
      %39 = sbr.rel (0) target = $region29
    $region28: #{tpu_custom_call.1} parent=1 // pred_region
      _
    $region29: #{tpu_custom_call.1} parent=1 // pred_fallthru
      _
    // Predicated region
    $region30: #{tpu_custom_call.1} parent=1 // pred_check
      _
    $region31: #{tpu_custom_call.1} parent=1 // pred_check_branch
      %41 = sbr.rel (0) target = $region33
    $region32: #{tpu_custom_call.1} parent=1 // pred_region
      _
    $region33: #{tpu_custom_call.1} parent=1 // pred_fallthru
      _
    // Predicated region
    $region34: #{tpu_custom_call.1} parent=1 // pred_check
      _
    $region35: #{tpu_custom_call.1} parent=1 // pred_check_branch
      %43 = sbr.rel (0) target = $region37
    $region36: #{tpu_custom_call.1} parent=1 // pred_region
      _
    $region37: #{tpu_custom_call.1} parent=1 // pred_fallthru
      _
    // Predicated region
    $region38: #{tpu_custom_call.1} parent=1 // pred_check
      _
    $region39: #{tpu_custom_call.1} parent=1 // pred_check_branch
      %45 = sbr.rel (0) target = $region41
    $region40: #{tpu_custom_call.1} parent=1 // pred_region
      %46 = dma.done [#allocation3], 256
    $region41: #{tpu_custom_call.1} parent=1 // pred_fallthru
      _
    %v48 = vld [vmem:[%s0] sm:$0xff]
    %v49 = vpack.c.bf16 %v48, %v48
    %v50 = vld [vmem:[#allocation2] sm:$0xf]
    %v51 = vld [vmem:[#allocation2 + $0x4] sm:$0xf]
    %v52 = vld [vmem:[#allocation2 + $0x8] sm:$0xf]
    %v53 = vld [vmem:[#allocation2 + $0xc] sm:$0xf]
    %v54 = vld [vmem:[%s2] sm:$0x1]
    %v56 = vlaneseq
    %v57 = vshrl.u32 %v56, 7
    %v58 = vsub.s32 0, %v57
    %v59 = vrot.slane %v54, %v58
    %v65 = vunpack.c.l.b16 %v50
    %v66 = vunpack.c.l.b16 %v51
    %v67 = vunpack.c.l.b16 %v52
    %v68 = vunpack.c.l.b16 %v53
    %v69 = vpack.c.b16 %v66, %v65
    %v70 = vpack.c.b16 %v68, %v67
    %vm73 = vcmask 261120
    %v75 = vsel %vm73, %v49, 0
    %77 = vmatprep.subr.bf16.mxu0 0
    %78 = vmatpush1.bf16.msra.mxu0 %v69
    %79 = vmatprep.subr.bf16.mxu0 0
    %80 = vmatpush1.bf16.msra.mxu0 %v70
    %81 = vmatprep.subr.bf16.mxu0 0
    %82 = vmatpush1.bf16.msra.mxu0 0
    %83 = vmatprep.subr.bf16.mxu0 0
    %84 = vmatpush1.bf16.msra.mxu0 0
    %85 = vmatprep.subr.bf16.mxu0 0
    %86 = vmatpush1.bf16.msra.mxu0 0
    %87 = vmatprep.subr.bf16.mxu0 0
    %88 = vmatpush1.bf16.msra.mxu0 0
    %89 = vmatprep.subr.bf16.mxu0 0
    %90 = vmatpush1.bf16.msra.mxu0 0
    %91 = vmatprep.subr.bf16.mxu0 0
    %92 = vmatpush1.bf16.msra.mxu0 0
    %93 = vmatprep.subr.bf16.mxu0 0
    %94 = vmatpush1.bf16.msra.mxu0 0
    %95 = vmatprep.subr.bf16.mxu0 0
    %96 = vmatpush1.bf16.msra.mxu0 0
    %97 = vmatprep.subr.bf16.mxu0 0
    %98 = vmatpush1.bf16.msra.mxu0 0
    %99 = vmatprep.subr.bf16.mxu0 0
    %100 = vmatpush1.bf16.msra.mxu0 0
    %101 = vmatprep.subr.bf16.mxu0 0
    %102 = vmatpush1.bf16.msra.mxu0 0
    %103 = vmatprep.subr.bf16.mxu0 0
    %104 = vmatpush1.bf16.msra.mxu0 0
    %105 = vmatprep.subr.bf16.mxu0 0
    %106 = vmatpush1.bf16.msra.mxu0 0
    %107 = vmatprep.subr.bf16.mxu0 0
    %108 = vmatpush1.bf16.msra.mxu0 0
    %109 = vmatprep.mubr.bf16.mxu0 0
    %110 = vmatmul.mubr.bf16.gmra.mrb[0].mxu0 %v75
    %v111 = vpop.f32.mrb[0].mxu0
    %v112 = vadd.f32 %v59, %v111
    %v113 = vpop.f32.mrb[0].mxu0
    %v114 = vpop.f32.mrb[0].mxu0
    %v115 = vpop.f32.mrb[0].mxu0
    %116 = vdwg.mxu0
    %v117 = vmax.f32 %v112, 0.0
    %v118 = vpack.c.bf16 %v117, %v117
    %v119 = vld [vmem:[%s3] sm:$0xf]
    %v120 = vld [vmem:[%s3 + $0x4] sm:$0xf]
    %v121 = vld [vmem:[%s3 + $0x8] sm:$0xf]
    %v122 = vld [vmem:[%s3 + $0xc] sm:$0xf]
    %v123 = vld [vmem:[%s3 + $0x10] sm:$0xf]
    %v124 = vld [vmem:[%s3 + $0x14] sm:$0xf]
    %v125 = vld [vmem:[%s3 + $0x18] sm:$0xf]
    %v126 = vld [vmem:[%s3 + $0x1c] sm:$0xf]
    %v127 = vld [vmem:[%s4] sm:$0x1]
    %v129 = vlaneseq
    %v130 = vshrl.u32 %v129, 7
    %v131 = vsub.s32 0, %v130
    %v132 = vrot.slane %v127, %v131
    %v142 = vunpack.c.l.b16 %v119
    %v143 = vunpack.c.l.b16 %v120
    %v144 = vunpack.c.l.b16 %v121
    %v145 = vunpack.c.l.b16 %v122
    %v146 = vunpack.c.l.b16 %v123
    %v147 = vunpack.c.l.b16 %v124
    %v148 = vunpack.c.l.b16 %v125
    %v149 = vunpack.c.l.b16 %v126
    %v150 = vpack.c.b16 %v143, %v142
    %v151 = vpack.c.b16 %v145, %v144
    %v152 = vpack.c.b16 %v147, %v146
    %v153 = vpack.c.b16 %v149, %v148
    %vm158 = vcmask 523264
    %v160 = vsel %vm158, %v118, 0
    %162 = vmatprep.subr.bf16.mxu0 0
    %163 = vmatpush1.bf16.msra.mxu0 %v150
    %164 = vmatprep.subr.bf16.mxu0 0
    %165 = vmatpush1.bf16.msra.mxu0 %v151
    %166 = vmatprep.subr.bf16.mxu0 0
    %167 = vmatpush1.bf16.msra.mxu0 %v152
    %168 = vmatprep.subr.bf16.mxu0 0
    %169 = vmatpush1.bf16.msra.mxu0 %v153
    %170 = vmatprep.subr.bf16.mxu0 0
    %171 = vmatpush1.bf16.msra.mxu0 0
    %172 = vmatprep.subr.bf16.mxu0 0
    %173 = vmatpush1.bf16.msra.mxu0 0
    %174 = vmatprep.subr.bf16.mxu0 0
    %175 = vmatpush1.bf16.msra.mxu0 0
    %176 = vmatprep.subr.bf16.mxu0 0
    %177 = vmatpush1.bf16.msra.mxu0 0
    %178 = vmatprep.subr.bf16.mxu0 0
    %179 = vmatpush1.bf16.msra.mxu0 0
    %180 = vmatprep.subr.bf16.mxu0 0
    %181 = vmatpush1.bf16.msra.mxu0 0
    %182 = vmatprep.subr.bf16.mxu0 0
    %183 = vmatpush1.bf16.msra.mxu0 0
    %184 = vmatprep.subr.bf16.mxu0 0
    %185 = vmatpush1.bf16.msra.mxu0 0
    %186 = vmatprep.subr.bf16.mxu0 0
    %187 = vmatpush1.bf16.msra.mxu0 0
    %188 = vmatprep.subr.bf16.mxu0 0
    %189 = vmatpush1.bf16.msra.mxu0 0
    %190 = vmatprep.subr.bf16.mxu0 0
    %191 = vmatpush1.bf16.msra.mxu0 0
    %192 = vmatprep.subr.bf16.mxu0 0
    %193 = vmatpush1.bf16.msra.mxu0 0
    %194 = vmatprep.mubr.bf16.mxu0 0
    %195 = vmatmul.mubr.bf16.gmra.mrb[0].mxu0 %v160
    %v196 = vpop.f32.mrb[0].mxu0
    %v197 = vadd.f32 %v132, %v196
    %v198 = vpop.f32.mrb[0].mxu0
    %v199 = vpop.f32.mrb[0].mxu0
    %v200 = vpop.f32.mrb[0].mxu0
    %201 = vdwg.mxu0
    %v202 = vsel %vm158, %v197, 0.0
    %203 = vadd.xlane.f32.xlu0 %v202
    %v204 = vpop.xlane.xlu0 %203
    %v205 = vrcp.pop 64.0
    %v206 = vmul.f32 %v204, %v205
    %v207 = vsub.f32 %v197, %v206
    %v208 = vmul.f32 %v207, %v207
    %v209 = vsel %vm158, %v208, 0.0
    %210 = vadd.xlane.f32.xlu0 %v209
    %v211 = vpop.xlane.xlu0 %210
    %v212 = vmul.f32 %v211, %v205
    %v213 = vadd.f32 %v212, 1e-05
    %v214 = vrsqrt.pop %v213
    %v215 = vmul.f32 %v207, %v214
    %v216 = vld [vmem:[%s5] sm:$0x1]
    %v218 = vlaneseq
    %v219 = vshrl.u32 %v218, 7
    %v220 = vsub.s32 0, %v219
    %v221 = vrot.slane %v216, %v220
    %v223 = vmul.f32 %v215, %v221
    %v224 = vld [vmem:[%s6] sm:$0x1]
    %v226 = vlaneseq
    %v227 = vshrl.u32 %v226, 7
    %v228 = vsub.s32 0, %v227
    %v229 = vrot.slane %v224, %v228
    %v231 = vadd.f32 %v223, %v229
    %v232 = vmax.f32 %v231, 0.0
    %v233 = vpack.c.bf16 %v232, %v232
    %v234 = vld [vmem:[%s7] sm:$0xf]
    %v235 = vld [vmem:[%s7 + $0x4] sm:$0xf]
    %v236 = vld [vmem:[%s7 + $0x8] sm:$0xf]
    %v237 = vld [vmem:[%s7 + $0xc] sm:$0xf]
    %v238 = vld [vmem:[%s7 + $0x10] sm:$0xf]
    %v239 = vld [vmem:[%s7 + $0x14] sm:$0xf]
    %v240 = vld [vmem:[%s7 + $0x18] sm:$0xf]
    %v241 = vld [vmem:[%s7 + $0x1c] sm:$0xf]
    %v242 = vld [vmem:[%s8] sm:$0x1]
    %v244 = vlaneseq
    %v245 = vshrl.u32 %v244, 7
    %v246 = vsub.s32 0, %v245
    %v247 = vrot.slane %v242, %v246
    %v257 = vunpack.c.l.b16 %v234
    %v258 = vunpack.c.l.b16 %v235
    %v259 = vunpack.c.l.b16 %v236
    %v260 = vunpack.c.l.b16 %v237
    %v261 = vunpack.c.l.b16 %v238
    %v262 = vunpack.c.l.b16 %v239
    %v263 = vunpack.c.l.b16 %v240
    %v264 = vunpack.c.l.b16 %v241
    %v265 = vpack.c.b16 %v258, %v257
    %v266 = vpack.c.b16 %v260, %v259
    %v267 = vpack.c.b16 %v262, %v261
    %v268 = vpack.c.b16 %v264, %v263
    %v274 = vsel %vm158, %v233, 0
    %276 = vmatprep.subr.bf16.mxu0 0
    %277 = vmatpush1.bf16.msra.mxu0 %v265
    %278 = vmatprep.subr.bf16.mxu0 0
    %279 = vmatpush1.bf16.msra.mxu0 %v266
    %280 = vmatprep.subr.bf16.mxu0 0
    %281 = vmatpush1.bf16.msra.mxu0 %v267
    %282 = vmatprep.subr.bf16.mxu0 0
    %283 = vmatpush1.bf16.msra.mxu0 %v268
    %284 = vmatprep.subr.bf16.mxu0 0
    %285 = vmatpush1.bf16.msra.mxu0 0
    %286 = vmatprep.subr.bf16.mxu0 0
    %287 = vmatpush1.bf16.msra.mxu0 0
    %288 = vmatprep.subr.bf16.mxu0 0
    %289 = vmatpush1.bf16.msra.mxu0 0
    %290 = vmatprep.subr.bf16.mxu0 0
    %291 = vmatpush1.bf16.msra.mxu0 0
    %292 = vmatprep.subr.bf16.mxu0 0
    %293 = vmatpush1.bf16.msra.mxu0 0
    %294 = vmatprep.subr.bf16.mxu0 0
    %295 = vmatpush1.bf16.msra.mxu0 0
    %296 = vmatprep.subr.bf16.mxu0 0
    %297 = vmatpush1.bf16.msra.mxu0 0
    %298 = vmatprep.subr.bf16.mxu0 0
    %299 = vmatpush1.bf16.msra.mxu0 0
    %300 = vmatprep.subr.bf16.mxu0 0
    %301 = vmatpush1.bf16.msra.mxu0 0
    %302 = vmatprep.subr.bf16.mxu0 0
    %303 = vmatpush1.bf16.msra.mxu0 0
    %304 = vmatprep.subr.bf16.mxu0 0
    %305 = vmatpush1.bf16.msra.mxu0 0
    %306 = vmatprep.subr.bf16.mxu0 0
    %307 = vmatpush1.bf16.msra.mxu0 0
    %308 = vmatprep.mubr.bf16.mxu0 0
    %309 = vmatmul.mubr.bf16.gmra.mrb[0].mxu0 %v274
    %v310 = vpop.f32.mrb[0].mxu0
    %v311 = vadd.f32 %v247, %v310
    %v312 = vpop.f32.mrb[0].mxu0
    %v313 = vpop.f32.mrb[0].mxu0
    %v314 = vpop.f32.mrb[0].mxu0
    %315 = vdwg.mxu0
    %v316 = vtanh.pop %v311
    %vm317 = vcmask 64512
    %318 = vst.msk [vmem:[#allocation5] sm:$0xff] %vm317, %v316
    // Predicated region
    $region42: #{tpu_custom_call.1} parent=1 // pred_check
      _
    $region43: #{tpu_custom_call.1} parent=1 // pred_check_branch
      %320 = sbr.rel (0) target = $region45
    $region44: #{tpu_custom_call.1} parent=1 // pred_region
      %s322 = ssub.s32 128, 128
      %323 = vsyncadd [#allocation4], %s322
      %s325 = sshll.u32 [#allocation5], 4
      %s326 = int_to_ptr.vmem [resolvable:$true] %s325
      %328 = dma.vmem_to_hbm [thread:$0]  %s326, 128, %s9, [#allocation4]
    $region45: #{tpu_custom_call.1} parent=1 // pred_fallthru
      _
    // Predicated region
    $region46: #{tpu_custom_call.1} parent=1 // pred_check
      _
    $region47: #{tpu_custom_call.1} parent=1 // pred_check_branch
      %330 = sbr.rel (0) target = $region49
    $region48: #{tpu_custom_call.1} parent=1 // pred_region
      %331 = dma.done [#allocation4], 128
    $region49: #{tpu_custom_call.1} parent=1 // pred_fallthru
      _
    %332 = vsyncpa [#allocation3], 1
    %333 = vsyncpa [#allocation4], 1

</llo_original>
